<compile_context>
chip_gen: v5e
topology: v5e:2x2
jax: 0.10.0
libtpu: 0.0.40
codegen_flags: <defaults>
</compile_context>

<pallas_src>
import functools
import math

import jax
import jax.numpy as jnp
from jax.experimental import pallas as pl
from jax.experimental.pallas import tpu as pltpu


def _round_up(x: int, mult: int) -> int:
    return ((x + mult - 1) // mult) * mult


def _cdiv(a: int, b: int) -> int:
    return -(-a // b)


def _fold_factor(u: int, k: int, itemsize: int, max_w_bytes: int = 2 << 20) -> int:
    """Smallest F making u*F a multiple of 128 lanes, capped by the resident
    block-diagonal W' (F*k, F*u) VMEM footprint."""
    if u % 128 == 0:
        return 1
    f = 128 // math.gcd(u, 128)
    if (f * k) * (f * u) * itemsize > max_w_bytes:
        return 1
    return f


def _dense_fold_kernel(x_ref, w_ref, b_ref, o_ref, *, use_relu: bool, use_vpu: bool):
    # x: (TM, KF), w: (KF, UF), b: (1, UF), o: (TM, UF); all resident in VMEM.
    x = x_ref[...]
    w = w_ref[...]
    b = b_ref[...]
    kf = w.shape[0]

    if use_vpu:
        # Tiny K: a handful of broadcast FMAs on the VPU; keeps the MXU /
        # vector-extended slot free and avoids f32 MXU emulation passes.
        y = b.astype(jnp.float32) + (
            x[:, 0:1].astype(jnp.float32) * w[0:1, :].astype(jnp.float32))
        for j in range(1, kf):
            y = y + x[:, j:j + 1].astype(jnp.float32) * w[j:j + 1, :].astype(jnp.float32)
    else:
        y = jnp.dot(x, w, preferred_element_type=jnp.float32) + b.astype(jnp.float32)

    if use_relu:
        y = jnp.maximum(y, 0.0)
    o_ref[...] = y.astype(o_ref.dtype)


def traj_encoding_forward(trajs: jax.Array,
                          w: jax.Array,
                          b: jax.Array,
                          *,
                          use_relu: bool = False,
                          max_tile_rows: int = 8192,
                          vmem_tile_budget: int = 24 << 20) -> jax.Array:
    """TrajEncoding.forward (Tlayer=None): fc1(trajs).

    trajs: (batch, N, input_units)
    w:     (input_units, output_units)
    b:     (output_units,)
    returns (batch, N, output_units)
    """
    batch, n, k = trajs.shape
    ku, u = w.shape
    assert ku == k, "weight shape must be (input_units, output_units)"
    m = batch * n
    out_dtype = trajs.dtype
    x_isz = jnp.dtype(trajs.dtype).itemsize
    o_isz = jnp.dtype(out_dtype).itemsize
    w_isz = jnp.dtype(w.dtype).itemsize

    # ---- fold F rows together so the output last dim is lane-dense (%128) ----
    f = _fold_factor(u, k, w_isz)
    kf, uf = k * f, u * f

    if f > 1:
        eye = jnp.eye(f, dtype=w.dtype)
        # W'[a*k + k_, g*u + u_] = W[k_, u_] if a == g else 0   (block diagonal)
        w_f = jnp.einsum('ag,ku->akgu', eye, w).reshape(kf, uf)
        b_f = jnp.tile(b, f).reshape(1, uf)
    else:
        w_f = w
        b_f = b.reshape(1, uf)

    # ---- fold the row dimension; only pad if m is not a multiple of F -------
    m_folded = _cdiv(m, f)
    m_in = m_folded * f                       # == m whenever m % f == 0
    x2d = trajs.reshape(m, k)
    if m_in > m:
        # <= f-1 padded rows; the matching output rows are trimmed below.
        x2d = jnp.pad(x2d, ((0, m_in - m), (0, 0)))
    xf = x2d.reshape(m_folded, kf)

    # ---- pick the row tile from a VMEM byte budget ---------------------------
    # Per (double-buffered) pipeline row: lane-padded x tile + output tile.
    x_row_bytes = _round_up(kf, 128) * x_isz
    o_row_bytes = uf * o_isz
    per_row = 2 * (x_row_bytes + o_row_bytes)
    tm = max(8, (vmem_tile_budget // per_row) // 8 * 8)
    tm = min(tm, max_tile_rows)
    # Keep >= 4 grid steps when possible so v7x megacore can shard the grid.
    tm = min(tm, _round_up(max(_cdiv(m_folded, 4), 1), 8))
    grid = (_cdiv(m_folded, tm),)              # ragged last block: stores masked

    # Explicit scoped-VMEM limit (v5e default of 16 MiB is too tight for big tiles).
    w_resident_bytes = 2 * (_round_up(kf, 8) * uf * w_isz + 8 * uf * w_isz)
    vmem_limit = int(per_row * tm + w_resident_bytes + (4 << 20))
    vmem_limit = max(vmem_limit, 16 << 20)

    use_vpu = kf <= 8
    kernel = functools.partial(_dense_fold_kernel, use_relu=use_relu, use_vpu=use_vpu)

    cost = pl.CostEstimate(
        flops=2 * m * k * u,
        transcendentals=0,
        bytes_accessed=m * k * x_isz + k * u * w_isz + u * w_isz + m * u * o_isz,
    )

    out_f = pl.pallas_call(
        kernel,
        out_shape=jax.ShapeDtypeStruct((m_folded, uf), out_dtype),
        grid=grid,
        in_specs=[
            pl.BlockSpec((tm, kf), lambda i: (i, 0)),      # streamed row tiles
            pl.BlockSpec((kf, uf), lambda i: (0, 0)),      # W' resident (fetched once)
            pl.BlockSpec((1, uf), lambda i: (0, 0)),       # b' resident
        ],
        out_specs=pl.BlockSpec((tm, uf), lambda i: (i, 0)),
        compiler_params=pltpu.CompilerParams(
            dimension_semantics=("parallel",),             # megacore sharding on v7x
            vmem_limit_bytes=vmem_limit),
        cost_estimate=cost,
    )(xf, w_f, b_f)

    # Folded output is bit-identical (row-major) to the (m_in, u) output.
    out2d = out_f.reshape(m_in, u)
    if m_in > m:
        out2d = out2d[:m]                      # only when m % f != 0 (<= f-1 rows)
    return out2d.reshape(batch, n, u)


if __name__ == "__main__":
    # Module config: input_units=2 (trajectory coords), output_units=64,
    # activation=None (default) -> pure linear layer.
    batch, n_points, input_units, output_units = 2, 8, 2, 64

    key = jax.random.PRNGKey(0)
    k_traj, k_w, k_b = jax.random.split(key, 3)

    trajs = jax.random.normal(k_traj, (batch, n_points, input_units),
                              dtype=jnp.float32)
    w = jax.random.normal(k_w, (input_units, output_units),
                          dtype=jnp.float32) * 0.1
    b = jax.random.normal(k_b, (output_units,), dtype=jnp.float32) * 0.01

    out = traj_encoding_forward(trajs, w, b, use_relu=False)
    out = jax.block_until_ready(out)

    # Reference check in plain JAX.
    ref = trajs.reshape(-1, input_units) @ w + b
    ref = ref.reshape(batch, n_points, output_units)
    assert out.shape == (batch, n_points, output_units)
    assert jnp.allclose(out, ref, atol=1e-5, rtol=1e-5)

    print("KERNEL_OK")
</pallas_src>

<mosaic_0001>
module attributes {stable_mosaic.version = 11 : i64} {
  func.func @_dense_fold_kernel(%arg0: i32, %arg1: memref<8x4xf32, #tpu.memory_space<vmem>>, %arg2: memref<4x128xf32, #tpu.memory_space<vmem>>, %arg3: memref<1x128xf32, #tpu.memory_space<vmem>>, %arg4: memref<8x128xf32, #tpu.memory_space<vmem>>) attributes {dimension_semantics = [#tpu.dimension_semantics<parallel>], iteration_bounds = array<i64: 1>, scalar_prefetch = 0 : i64, scratch_operands = 0 : i64, tpu.core_type = #tpu.core_type<tc>, window_params = [{transform_indices = @transform_0, window_bounds = array<i64: 8, 4>}, {pipeline_mode = #tpu.pipeline_mode<synchronous>, transform_indices = @transform_1, window_bounds = array<i64: 4, 128>}, {pipeline_mode = #tpu.pipeline_mode<synchronous>, transform_indices = @transform_2, window_bounds = array<i64: 1, 128>}, {transform_indices = @transform_3, window_bounds = array<i64: 8, 128>}]} {
    %c0 = arith.constant 0 : index
    %c0_0 = arith.constant 0 : index
    %0 = vector.load %arg1[%c0, %c0_0] : memref<8x4xf32, #tpu.memory_space<vmem>>, vector<8x4xf32>
    %c0_1 = arith.constant 0 : index
    %c0_2 = arith.constant 0 : index
    %1 = vector.load %arg2[%c0_1, %c0_2] : memref<4x128xf32, #tpu.memory_space<vmem>>, vector<4x128xf32>
    %c0_3 = arith.constant 0 : index
    %c0_4 = arith.constant 0 : index
    %2 = vector.load %arg3[%c0_3, %c0_4] : memref<1x128xf32, #tpu.memory_space<vmem>>, vector<1x128xf32>
    %3 = vector.extract_strided_slice %0 {offsets = [0, 0], sizes = [8, 1], strides = [1, 1]} : vector<8x4xf32> to vector<8x1xf32>
    %4 = vector.extract_strided_slice %1 {offsets = [0, 0], sizes = [1, 128], strides = [1, 1]} : vector<4x128xf32> to vector<1x128xf32>
    %5 = vector.broadcast %3 : vector<8x1xf32> to vector<8x128xf32>
    %6 = vector.broadcast %4 : vector<1x128xf32> to vector<8x128xf32>
    %7 = arith.mulf %5, %6 : vector<8x128xf32>
    %8 = vector.broadcast %2 : vector<1x128xf32> to vector<8x128xf32>
    %9 = arith.addf %8, %7 : vector<8x128xf32>
    %10 = vector.extract_strided_slice %0 {offsets = [0, 1], sizes = [8, 1], strides = [1, 1]} : vector<8x4xf32> to vector<8x1xf32>
    %11 = vector.extract_strided_slice %1 {offsets = [1, 0], sizes = [1, 128], strides = [1, 1]} : vector<4x128xf32> to vector<1x128xf32>
    %12 = vector.broadcast %10 : vector<8x1xf32> to vector<8x128xf32>
    %13 = vector.broadcast %11 : vector<1x128xf32> to vector<8x128xf32>
    %14 = arith.mulf %12, %13 : vector<8x128xf32>
    %15 = arith.addf %9, %14 : vector<8x128xf32>
    %16 = vector.extract_strided_slice %0 {offsets = [0, 2], sizes = [8, 1], strides = [1, 1]} : vector<8x4xf32> to vector<8x1xf32>
    %17 = vector.extract_strided_slice %1 {offsets = [2, 0], sizes = [1, 128], strides = [1, 1]} : vector<4x128xf32> to vector<1x128xf32>
    %18 = vector.broadcast %16 : vector<8x1xf32> to vector<8x128xf32>
    %19 = vector.broadcast %17 : vector<1x128xf32> to vector<8x128xf32>
    %20 = arith.mulf %18, %19 : vector<8x128xf32>
    %21 = arith.addf %15, %20 : vector<8x128xf32>
    %22 = vector.extract_strided_slice %0 {offsets = [0, 3], sizes = [8, 1], strides = [1, 1]} : vector<8x4xf32> to vector<8x1xf32>
    %23 = vector.extract_strided_slice %1 {offsets = [3, 0], sizes = [1, 128], strides = [1, 1]} : vector<4x128xf32> to vector<1x128xf32>
    %24 = vector.broadcast %22 : vector<8x1xf32> to vector<8x128xf32>
    %25 = vector.broadcast %23 : vector<1x128xf32> to vector<8x128xf32>
    %26 = arith.mulf %24, %25 : vector<8x128xf32>
    %27 = arith.addf %21, %26 : vector<8x128xf32>
    %c0_5 = arith.constant 0 : index
    %c0_6 = arith.constant 0 : index
    %28 = vector.load %arg4[%c0_5, %c0_6] : memref<8x128xf32, #tpu.memory_space<vmem>>, vector<8x128xf32>
    tpu.vector_store %arg4[%c0_5, %c0_6], %27 {strides = array<i32>} : memref<8x128xf32, #tpu.memory_space<vmem>>, vector<8x128xf32>,
    return
  }
  func.func @transform_0(%arg0: i32) -> (i32, i32) {
    %c0_i32 = arith.constant 0 : i32
    %c0_i32_0 = arith.constant 0 : i32
    return %arg0, %c0_i32 : i32, i32
  }
  func.func @transform_1(%arg0: i32) -> (i32, i32) {
    %c0_i32 = arith.constant 0 : i32
    %c0_i32_0 = arith.constant 0 : i32
    %c0_i32_1 = arith.constant 0 : i32
    return %c0_i32, %c0_i32_0 : i32, i32
  }
  func.func @transform_2(%arg0: i32) -> (i32, i32) {
    %c0_i32 = arith.constant 0 : i32
    %c0_i32_0 = arith.constant 0 : i32
    %c0_i32_1 = arith.constant 0 : i32
    return %c0_i32, %c0_i32_0 : i32, i32
  }
  func.func @transform_3(%arg0: i32) -> (i32, i32) {
    %c0_i32 = arith.constant 0 : i32
    %c0_i32_0 = arith.constant 0 : i32
    return %arg0, %c0_i32 : i32, i32
  }
}

</mosaic_0001>

<llo_original>
// kernel: tpu_custom_call.1
$region0: #{tpu_custom_call.1}
  #allocation0 [shape = 'u32[]', space=smem, size = 0x4, offset = 0x4, fixed_abs, tag = 'smem constant byte address 0x4 - core index']
  #allocation1 [shape = 'u32[72,128]{1,0:T(1,128)}', space=vmem, size = 0x9000, scoped, tag = 'internal scratch']
  %s0 = inlined_call_operand.vmem [shape: f32[8,4], index: 0, kind: input, shape index: {}]
  %s1 = inlined_call_operand.vmem [shape: f32[4,128], index: 1, kind: input, shape index: {}]
  %s2 = inlined_call_operand.vmem [shape: f32[1,128], index: 2, kind: input, shape index: {}]
  %s3 = inlined_call_operand.hbm [shape: f32[8,128], index: 3, kind: output, shape index: {}]
  %s4 = sld [smem:[#allocation0]]
  $region22: #{tpu_custom_call.1} parent=0
    _
  %s6 = ssub.s32 1, %s4
  %s7 = scalar_select 0, %s6, %s4
  $region1: #{tpu_custom_call.1} parent=0
    #allocation2 [shape = 'u8[4096]{0}', space=vmem, size = 0x1000, scoped, tag = 'output window, operand 0, single buffered']
    #allocation3 [shape = 's32[1]{0}', space=sflag, size = 0x4, scoped, tag = 'scoped memory for tpu_custom_call.1']
    %8 = vsyncpa [#allocation3], 0
    // Predicated region
    $region2: #{tpu_custom_call.1} parent=1 // pred_check
      _
    $region3: #{tpu_custom_call.1} parent=1 // pred_check_branch
      %10 = sbr.rel (0) target = $region5
    $region4: #{tpu_custom_call.1} parent=1 // pred_region
      _
    $region5: #{tpu_custom_call.1} parent=1 // pred_fallthru
      _
    // Predicated region
    $region6: #{tpu_custom_call.1} parent=1 // pred_check
      _
    $region7: #{tpu_custom_call.1} parent=1 // pred_check_branch
      %12 = sbr.rel (0) target = $region9
    $region8: #{tpu_custom_call.1} parent=1 // pred_region
      _
    $region9: #{tpu_custom_call.1} parent=1 // pred_fallthru
      _
    // Predicated region
    $region10: #{tpu_custom_call.1} parent=1 // pred_check
      _
    $region11: #{tpu_custom_call.1} parent=1 // pred_check_branch
      %14 = sbr.rel (0) target = $region13
    $region12: #{tpu_custom_call.1} parent=1 // pred_region
      _
    $region13: #{tpu_custom_call.1} parent=1 // pred_fallthru
      _
    %v15 = vld [vmem:[%s0] sm:$0xff]
    %v16 = vld [vmem:[%s1] sm:$0xf]
    %v17 = vld [vmem:[%s2] sm:$0x1]
    %19 = vset.pattern.permute.xlu0 0
    %20 = vperm.xlu0 %19, %v15
    %v21 = vpop.permute.xlu0 %20
    %v23 = vperm.slane %v16, 0
    %v24 = vmul.f32 %v21, %v23
    %v26 = vperm.slane %v17, 0
    %v28 = vadd.f32 %v26, %v24
    %29 = vset.pattern.permute.xlu0 1
    %30 = vperm.xlu0 %29, %v15
    %v31 = vpop.permute.xlu0 %30
    %v33 = vperm.slane %v16, 1
    %v34 = vmul.f32 %v31, %v33
    %v35 = vadd.f32 %v28, %v34
    %36 = vset.pattern.permute.xlu0 2
    %37 = vperm.xlu0 %36, %v15
    %v38 = vpop.permute.xlu0 %37
    %v40 = vperm.slane %v16, 2
    %v41 = vmul.f32 %v38, %v40
    %v42 = vadd.f32 %v35, %v41
    %43 = vset.pattern.permute.xlu0 3
    %44 = vperm.xlu0 %43, %v15
    %v45 = vpop.permute.xlu0 %44
    %v47 = vperm.slane %v16, 3
    %v48 = vmul.f32 %v45, %v47
    %v49 = vadd.f32 %v42, %v48
    %50 = vst [vmem:[#allocation2] sm:$0xff] %v49
    // Predicated region
    $region14: #{tpu_custom_call.1} parent=1 // pred_check
      _
    $region15: #{tpu_custom_call.1} parent=1 // pred_check_branch
      %52 = sbr.rel (0) target = $region17
    $region16: #{tpu_custom_call.1} parent=1 // pred_region
      %54 = vsyncadd [#allocation3], 0
      %s56 = sshll.u32 [#allocation2], 4
      %s57 = int_to_ptr.vmem [resolvable:$true] %s56
      %s58 = sshll.u32 %s3, 4
      %s59 = int_to_ptr.hbm [resolvable:$true] %s58
      %61 = dma.vmem_to_hbm [thread:$0]  %s57, 128, %s59, [#allocation3]
    $region17: #{tpu_custom_call.1} parent=1 // pred_fallthru
      _
    // Predicated region
    $region18: #{tpu_custom_call.1} parent=1 // pred_check
      _
    $region19: #{tpu_custom_call.1} parent=1 // pred_check_branch
      %63 = sbr.rel (0) target = $region21
    $region20: #{tpu_custom_call.1} parent=1 // pred_region
      %65 = dma.done [#allocation3], 128
    $region21: #{tpu_custom_call.1} parent=1 // pred_fallthru
      _
    %66 = vsyncpa [#allocation3], 1

</llo_original>
